<compile_context>
chip_gen: v7x
topology: tpu7x:2x2x1
jax: 0.10.0
libtpu: 0.0.40
codegen_flags: <defaults>
</compile_context>

<pallas_src>
import jax
import jax.numpy as jnp
from jax.experimental import pallas as pl
from jax.experimental.pallas import tpu as pltpu


def _round_up(x, m):
    return (x + m - 1) // m * m


# ----------------------------- Pallas kernel ------------------------------ #
def gcn_kernel(a_ref, x_ref, w_ref, b_ref, o_ref, acc_ref):
    """grid = (row_panels, k_panels); k is the reduction axis (last).

    a_ref : (tm, tk)        bf16   A_hat row/col panel
    x_ref : (tk, C_in)      bf16   node-feature k-panel
    w_ref : (C_in, C_out_p) f32    full weight (constant across grid)
    b_ref : (1, C_out_p)    f32    full bias   (constant across grid)
    o_ref : (tm, C_out_p)   f32    lane-dense output row panel
    acc_ref: (tm, C_in)     f32    aggregation accumulator (scratch)
    """
    k = pl.program_id(1)

    @pl.when(k == 0)
    def _init():
        acc_ref[...] = jnp.zeros_like(acc_ref)

    # Aggregation: A_hat row-panel @ x k-panel on the MXU (bf16 in, f32 acc).
    acc_ref[...] += jnp.dot(
        a_ref[...], x_ref[...], preferred_element_type=jnp.float32
    )

    @pl.when(k == pl.num_programs(1) - 1)
    def _finalize():
        # Small feature transform + bias add, all in f32 (v5e-safe epilogue).
        out = jnp.dot(
            acc_ref[...], w_ref[...], preferred_element_type=jnp.float32
        ) + b_ref[...]
        o_ref[...] = out.astype(o_ref.dtype)


def gcn_forward_pallas(a_hat, x, weight, bias, *, tm=256, tk=512):
    """a_hat: [N, N] f32, x: [N, C_in] f32, weight: [C_in, C_out], bias: [1, C_out]."""
    n, c_in = x.shape
    c_out = weight.shape[1]

    # Lane-dense output: pad C_out up to a multiple of 128.
    c_out_p = _round_up(c_out, 128)

    # Clamp tiles for small problems; keep sublane(8)/lane(128) alignment.
    tm = min(tm, _round_up(n, 8))
    tk = min(tk, _round_up(n, 128))
    n_rows = _round_up(n, tm)
    n_cols = _round_up(n, tk)

    # Pad + cast the big streamed operands to bf16 (MXU-native, 2x less HBM).
    a_p = jnp.zeros((n_rows, n_cols), jnp.bfloat16).at[:n, :n].set(
        a_hat.astype(jnp.bfloat16))
    x_p = jnp.zeros((n_cols, c_in), jnp.bfloat16).at[:n, :].set(
        x.astype(jnp.bfloat16))
    # Small weight / bias stay in f32, padded to lane-dense width.
    w_p = jnp.zeros((c_in, c_out_p), jnp.float32).at[:, :c_out].set(
        weight.astype(jnp.float32))
    b_p = jnp.zeros((1, c_out_p), jnp.float32).at[:, :c_out].set(
        bias.astype(jnp.float32))

    grid = (n_rows // tm, n_cols // tk)

    cost = pl.CostEstimate(
        flops=2 * n_rows * n_cols * c_in + 2 * n_rows * c_in * c_out_p,
        transcendentals=0,
        bytes_accessed=(a_p.size * 2            # bf16 A_hat stream
                        + x_p.size * 2 * grid[0]  # x k-panels re-read per row panel
                        + n_rows * c_out_p * 4    # output
                        + (w_p.size + b_p.size) * 4),
    )

    out = pl.pallas_call(
        gcn_kernel,
        out_shape=jax.ShapeDtypeStruct((n_rows, c_out_p), jnp.float32),
        grid_spec=pltpu.PrefetchScalarGridSpec(
            num_scalar_prefetch=0,
            grid=grid,
            in_specs=[
                pl.BlockSpec((tm, tk), lambda i, k: (i, k)),        # A_hat panel
                pl.BlockSpec((tk, c_in), lambda i, k: (k, 0)),      # x k-panel
                pl.BlockSpec((c_in, c_out_p), lambda i, k: (0, 0)),  # W (constant)
                pl.BlockSpec((1, c_out_p), lambda i, k: (0, 0)),     # bias (constant)
            ],
            out_specs=pl.BlockSpec((tm, c_out_p), lambda i, k: (i, 0)),
            scratch_shapes=[pltpu.VMEM((tm, c_in), jnp.float32)],
        ),
        compiler_params=pltpu.CompilerParams(
            dimension_semantics=("parallel", "arbitrary"),
        ),
        cost_estimate=cost,
    )(a_p, x_p, w_p, b_p)

    return out[:n, :c_out]


# ------------------------------- JAX glue ---------------------------------- #
def build_normalized_adjacency(edge_index, edge_weight, num_nodes):
    """Dense A_hat = D^{-1/2} (A + I) D^{-1/2}, matching PyG gcn_norm
    (add_self_loops=True, improved=False)."""
    # TODO(synk): for large sparse graphs, replace this dense O(N^2) A_hat with
    # block-CSR + PrefetchScalarGridSpec scalar-prefetch to skip all-zero tiles.
    src = edge_index[0]
    dst = edge_index[1]
    if edge_weight is None:
        edge_weight = jnp.ones(src.shape[0], dtype=jnp.float32)

    # add self-loops with weight 1.0
    loop = jnp.arange(num_nodes, dtype=src.dtype)
    src = jnp.concatenate([src, loop])
    dst = jnp.concatenate([dst, loop])
    ew = jnp.concatenate([edge_weight, jnp.ones(num_nodes, dtype=jnp.float32)])

    # A[dst, src] += w  (messages flow source -> target, aggregated at target)
    a = jnp.zeros((num_nodes, num_nodes), dtype=jnp.float32)
    a = a.at[dst, src].add(ew)

    deg = a.sum(axis=1)  # weighted in-degree at each target node
    deg_inv_sqrt = jnp.where(deg > 0, 1.0 / jnp.sqrt(deg), 0.0)
    a_hat = deg_inv_sqrt[:, None] * a * deg_inv_sqrt[None, :]
    return a_hat


def init_gcn_params(key, in_channels, out_channels):
    """Deterministic Glorot-uniform weight + zero bias (GCNConv defaults)."""
    limit = jnp.sqrt(6.0 / (in_channels + out_channels))
    w = jax.random.uniform(
        key, (in_channels, out_channels), minval=-limit, maxval=limit,
        dtype=jnp.float32)
    b = jnp.zeros((1, out_channels), dtype=jnp.float32)
    return w, b


class GCN1:
    """Pallas-backed equivalent of the PyTorch GCN1 module."""

    def __init__(self, in_channels, out_channels, key):
        self.model_name = "GCN"
        self.weight, self.bias = init_gcn_params(key, in_channels, out_channels)

    def __call__(self, x, edge_index, edge_weight=None):
        n = x.shape[0]
        a_hat = build_normalized_adjacency(edge_index, edge_weight, n)
        return gcn_forward_pallas(a_hat, x, self.weight, self.bias)


# --------------------------------- main ------------------------------------ #
if __name__ == "__main__":
    key = jax.random.PRNGKey(0)
    k_feat, k_edge, k_ew, k_param = jax.random.split(key, 4)

    num_nodes = 16
    in_channels = 8
    out_channels = 32
    num_edges = 40

    x = jax.random.normal(k_feat, (num_nodes, in_channels), dtype=jnp.float32)
    edge_index = jax.random.randint(
        k_edge, (2, num_edges), minval=0, maxval=num_nodes, dtype=jnp.int32)
    edge_weight = jax.random.uniform(
        k_ew, (num_edges,), minval=0.5, maxval=1.5, dtype=jnp.float32)

    model = GCN1(in_channels, out_channels, k_param)
    out = model(x, edge_index, edge_weight)
    out = jax.block_until_ready(out)

    # sanity check against a pure-JAX f32 reference of the same math
    # (tolerance loosened because A_hat / x stream through the MXU in bf16)
    a_hat = build_normalized_adjacency(edge_index, edge_weight, num_nodes)
    ref = a_hat @ (x @ model.weight) + model.bias
    assert out.shape == (num_nodes, out_channels)
    assert jnp.allclose(out, ref, atol=5e-2, rtol=5e-2), (
        float(jnp.max(jnp.abs(out - ref))))

    print("KERNEL_OK")
</pallas_src>

<mosaic_0001>
module attributes {stable_mosaic.version = 11 : i64} {
  func.func @gcn_kernel(%arg0: i32, %arg1: i32, %arg2: memref<16x128xbf16, #tpu.memory_space<vmem>>, %arg3: memref<128x8xbf16, #tpu.memory_space<vmem>>, %arg4: memref<8x128xf32, #tpu.memory_space<vmem>>, %arg5: memref<1x128xf32, #tpu.memory_space<vmem>>, %arg6: memref<16x128xf32, #tpu.memory_space<vmem>>, %arg7: memref<16x8xf32, #tpu.memory_space<vmem>>) attributes {dimension_semantics = [#tpu.dimension_semantics<parallel>, #tpu.dimension_semantics<arbitrary>], iteration_bounds = array<i64: 1, 1>, scalar_prefetch = 0 : i64, scratch_operands = 1 : i64, tpu.core_type = #tpu.core_type<tc>, window_params = [{transform_indices = @transform_0, window_bounds = array<i64: 16, 128>}, {transform_indices = @transform_1, window_bounds = array<i64: 128, 8>}, {pipeline_mode = #tpu.pipeline_mode<synchronous>, transform_indices = @transform_2, window_bounds = array<i64: 8, 128>}, {pipeline_mode = #tpu.pipeline_mode<synchronous>, transform_indices = @transform_3, window_bounds = array<i64: 1, 128>}, {transform_indices = @transform_4, window_bounds = array<i64: 16, 128>}]} {
    %c0_i32 = arith.constant 0 : i32
    %0 = arith.cmpi eq, %arg1, %c0_i32 : i32
    %1 = arith.extui %0 : i1 to i32
    %c0_i32_0 = arith.constant 0 : i32
    %2 = arith.cmpi ne, %1, %c0_i32_0 : i32
    scf.if %2 {
      %cst_10 = arith.constant 0.000000e+00 : f32
      %12 = vector.broadcast %cst_10 : f32 to vector<16x8xf32>
      %c0_11 = arith.constant 0 : index
      %c0_12 = arith.constant 0 : index
      %13 = vector.load %arg7[%c0_11, %c0_12] : memref<16x8xf32, #tpu.memory_space<vmem>>, vector<16x8xf32>
      tpu.vector_store %arg7[%c0_11, %c0_12], %12 {strides = array<i32>} : memref<16x8xf32, #tpu.memory_space<vmem>>, vector<16x8xf32>,
    } else {
    }
    %c0 = arith.constant 0 : index
    %c0_1 = arith.constant 0 : index
    %3 = vector.load %arg7[%c0, %c0_1] : memref<16x8xf32, #tpu.memory_space<vmem>>, vector<16x8xf32>
    %c0_2 = arith.constant 0 : index
    %c0_3 = arith.constant 0 : index
    %4 = vector.load %arg2[%c0_2, %c0_3] : memref<16x128xbf16, #tpu.memory_space<vmem>>, vector<16x128xbf16>
    %c0_4 = arith.constant 0 : index
    %c0_5 = arith.constant 0 : index
    %5 = vector.load %arg3[%c0_4, %c0_5] : memref<128x8xbf16, #tpu.memory_space<vmem>>, vector<128x8xbf16>
    %cst = arith.constant dense<0.000000e+00> : vector<16x8xf32>
    %6 = tpu.matmul %4, %5, %cst {dimension_numbers = #tpu.dot_dimension_numbers<[1], [0], [0], [1], [0, 0, 1, 1], [], []>} : vector<16x128xbf16>, vector<128x8xbf16>, vector<16x8xf32> -> vector<16x8xf32>
    %7 = arith.addf %3, %6 : vector<16x8xf32>
    %c0_6 = arith.constant 0 : index
    %c0_7 = arith.constant 0 : index
    %8 = vector.load %arg7[%c0_6, %c0_7] : memref<16x8xf32, #tpu.memory_space<vmem>>, vector<16x8xf32>
    tpu.vector_store %arg7[%c0_6, %c0_7], %7 {strides = array<i32>} : memref<16x8xf32, #tpu.memory_space<vmem>>, vector<16x8xf32>,
    %c0_i32_8 = arith.constant 0 : i32
    %9 = arith.cmpi eq, %arg1, %c0_i32_8 : i32
    %10 = arith.extui %9 : i1 to i32
    %c0_i32_9 = arith.constant 0 : i32
    %11 = arith.cmpi ne, %10, %c0_i32_9 : i32
    scf.if %11 {
      %c0_10 = arith.constant 0 : index
      %c0_11 = arith.constant 0 : index
      %12 = vector.load %arg7[%c0_10, %c0_11] : memref<16x8xf32, #tpu.memory_space<vmem>>, vector<16x8xf32>
      %c0_12 = arith.constant 0 : index
      %c0_13 = arith.constant 0 : index
      %13 = vector.load %arg4[%c0_12, %c0_13] : memref<8x128xf32, #tpu.memory_space<vmem>>, vector<8x128xf32>
      %cst_14 = arith.constant dense<0.000000e+00> : vector<16x128xf32>
      %14 = tpu.matmul %12, %13, %cst_14 {dimension_numbers = #tpu.dot_dimension_numbers<[1], [0], [0], [1], [0, 0, 1, 1], [], []>} : vector<16x8xf32>, vector<8x128xf32>, vector<16x128xf32> -> vector<16x128xf32>
      %c0_15 = arith.constant 0 : index
      %c0_16 = arith.constant 0 : index
      %15 = vector.load %arg5[%c0_15, %c0_16] : memref<1x128xf32, #tpu.memory_space<vmem>>, vector<1x128xf32>
      %16 = vector.broadcast %15 : vector<1x128xf32> to vector<16x128xf32>
      %17 = arith.addf %14, %16 : vector<16x128xf32>
      %c0_17 = arith.constant 0 : index
      %c0_18 = arith.constant 0 : index
      %18 = vector.load %arg6[%c0_17, %c0_18] : memref<16x128xf32, #tpu.memory_space<vmem>>, vector<16x128xf32>
      tpu.vector_store %arg6[%c0_17, %c0_18], %17 {strides = array<i32>} : memref<16x128xf32, #tpu.memory_space<vmem>>, vector<16x128xf32>,
    } else {
    }
    return
  }
  func.func @transform_0(%arg0: i32, %arg1: i32) -> (i32, i32) {
    %c0_i32 = arith.constant 0 : i32
    return %arg0, %arg1 : i32, i32
  }
  func.func @transform_1(%arg0: i32, %arg1: i32) -> (i32, i32) {
    %c0_i32 = arith.constant 0 : i32
    %c0_i32_0 = arith.constant 0 : i32
    return %arg1, %c0_i32 : i32, i32
  }
  func.func @transform_2(%arg0: i32, %arg1: i32) -> (i32, i32) {
    %c0_i32 = arith.constant 0 : i32
    %c0_i32_0 = arith.constant 0 : i32
    %c0_i32_1 = arith.constant 0 : i32
    return %c0_i32, %c0_i32_0 : i32, i32
  }
  func.func @transform_3(%arg0: i32, %arg1: i32) -> (i32, i32) {
    %c0_i32 = arith.constant 0 : i32
    %c0_i32_0 = arith.constant 0 : i32
    %c0_i32_1 = arith.constant 0 : i32
    return %c0_i32, %c0_i32_0 : i32, i32
  }
  func.func @transform_4(%arg0: i32, %arg1: i32) -> (i32, i32) {
    %c0_i32 = arith.constant 0 : i32
    %c0_i32_0 = arith.constant 0 : i32
    return %arg0, %c0_i32 : i32, i32
  }
}

</mosaic_0001>

<llo_original>
// kernel: tpu_custom_call.1
$region0: #{tpu_custom_call.1}
  #allocation0 [shape = 'u32[]', space=smem, size = 0x4, offset = 0x4, fixed_abs, tag = 'smem constant byte address 0x4 - core index']
  #allocation1 [shape = 'u32[144,128]{1,0:T(1,128)}', space=vmem, size = 0x12000, scoped, tag = 'internal scratch']
  #allocation2 [shape = 'f32[16,8]{1,0:T(8,128)}', space=vmem, size = 0x2000, scoped, tag = 'scratch operand']
  %s0 = inlined_call_operand.vmem [shape: bf16[16,128], index: 0, kind: input, shape index: {}]
  %s1 = inlined_call_operand.vmem [shape: bf16[128,8], index: 1, kind: input, shape index: {}]
  %s2 = inlined_call_operand.vmem [shape: f32[8,128], index: 2, kind: input, shape index: {}]
  %s3 = inlined_call_operand.vmem [shape: f32[1,128], index: 3, kind: input, shape index: {}]
  %s4 = inlined_call_operand.hbm [shape: f32[16,128], index: 4, kind: output, shape index: {}]
  %s5 = sld [smem:[#allocation0]]
  $region34: #{tpu_custom_call.1} parent=0
    _
  %s7 = ssub.s32 1, %s5
  %s8 = scalar_select 0, %s7, %s5
  $region1: #{tpu_custom_call.1} parent=0
    #allocation3 [shape = 'u8[8192]{0}', space=vmem, size = 0x2000, scoped, tag = 'output window, operand 0, single buffered']
    #allocation4 [shape = 's32[1]{0}', space=sflag, size = 0x4, scoped, tag = 'scoped memory for tpu_custom_call.1']
    %9 = vsyncpa [#allocation4], 0
    // Predicated region
    $region2: #{tpu_custom_call.1} parent=1 // pred_check
      _
    $region3: #{tpu_custom_call.1} parent=1 // pred_check_branch
      %11 = sbr.rel (0) target = $region5
    $region4: #{tpu_custom_call.1} parent=1 // pred_region
      _
    $region5: #{tpu_custom_call.1} parent=1 // pred_fallthru
      _
    // Predicated region
    $region6: #{tpu_custom_call.1} parent=1 // pred_check
      _
    $region7: #{tpu_custom_call.1} parent=1 // pred_check_branch
      %13 = sbr.rel (0) target = $region9
    $region8: #{tpu_custom_call.1} parent=1 // pred_region
      _
    $region9: #{tpu_custom_call.1} parent=1 // pred_fallthru
      _
    // Predicated region
    $region10: #{tpu_custom_call.1} parent=1 // pred_check
      _
    $region11: #{tpu_custom_call.1} parent=1 // pred_check_branch
      %15 = sbr.rel (0) target = $region13
    $region12: #{tpu_custom_call.1} parent=1 // pred_region
      _
    $region13: #{tpu_custom_call.1} parent=1 // pred_fallthru
      _
    // Predicated region
    $region14: #{tpu_custom_call.1} parent=1 // pred_check
      _
    $region15: #{tpu_custom_call.1} parent=1 // pred_check_branch
      %17 = sbr.rel (0) target = $region17
    $region16: #{tpu_custom_call.1} parent=1 // pred_region
      _
    $region17: #{tpu_custom_call.1} parent=1 // pred_fallthru
      _
    %p19 = scmp.eq.s32.totalorder 0, 0
    // Predicated region
    $region18: #{tpu_custom_call.1} parent=1 // pred_check
      %p20 = pneg %p19
    $region19: #{tpu_custom_call.1} parent=1 // pred_check_branch
      %22 = sbr.rel (%p20) target = $region21
    $region20: #{tpu_custom_call.1} parent=1 // pred_region
      %vm23 = vcmask 64512
      %24 = vst.msk [vmem:[#allocation2] sm:$0xff] %vm23, 0.0
      %25 = vst.msk [vmem:[#allocation2 + $0x8] sm:$0xff] %vm23, 0.0
    $region21: #{tpu_custom_call.1} parent=1 // pred_fallthru
      _
    %v26 = vld [vmem:[#allocation2] sm:$0xff]
    %v27 = vld [vmem:[#allocation2 + $0x8] sm:$0xff]
    %v28 = vld [vmem:[%s0] sm:$0xf]
    %v29 = vld [vmem:[%s0 + $0x4] sm:$0xf]
    %v30 = vld [vmem:[%s1] sm:$0xf]
    %v31 = vld [vmem:[%s1 + $0x4] sm:$0xf]
    %v32 = vld [vmem:[%s1 + $0x8] sm:$0xf]
    %v33 = vld [vmem:[%s1 + $0xc] sm:$0xf]
    %v34 = vld [vmem:[%s1 + $0x10] sm:$0xf]
    %v35 = vld [vmem:[%s1 + $0x14] sm:$0xf]
    %v36 = vld [vmem:[%s1 + $0x18] sm:$0xf]
    %v37 = vld [vmem:[%s1 + $0x1c] sm:$0xf]
    %v38 = vld [vmem:[%s1 + $0x20] sm:$0xf]
    %v39 = vld [vmem:[%s1 + $0x24] sm:$0xf]
    %v40 = vld [vmem:[%s1 + $0x28] sm:$0xf]
    %v41 = vld [vmem:[%s1 + $0x2c] sm:$0xf]
    %v42 = vld [vmem:[%s1 + $0x30] sm:$0xf]
    %v43 = vld [vmem:[%s1 + $0x34] sm:$0xf]
    %v44 = vld [vmem:[%s1 + $0x38] sm:$0xf]
    %v45 = vld [vmem:[%s1 + $0x3c] sm:$0xf]
    %v48 = vunpack.c.l.b16 %v28
    %v49 = vunpack.c.l.b16 %v29
    %v50 = vpack.c.b16 %v49, %v48
    %v68 = vunpack.c.l.b16 %v30
    %v69 = vunpack.c.l.b16 %v31
    %v70 = vunpack.c.l.b16 %v32
    %v71 = vunpack.c.l.b16 %v33
    %v72 = vunpack.c.l.b16 %v34
    %v73 = vunpack.c.l.b16 %v35
    %v74 = vunpack.c.l.b16 %v36
    %v75 = vunpack.c.l.b16 %v37
    %v76 = vunpack.c.l.b16 %v38
    %v77 = vunpack.c.l.b16 %v39
    %v78 = vunpack.c.l.b16 %v40
    %v79 = vunpack.c.l.b16 %v41
    %v80 = vunpack.c.l.b16 %v42
    %v81 = vunpack.c.l.b16 %v43
    %v82 = vunpack.c.l.b16 %v44
    %v83 = vunpack.c.l.b16 %v45
    %v84 = vpack.c.b16 %v69, %v68
    %v85 = vpack.c.b16 %v71, %v70
    %v86 = vpack.c.b16 %v73, %v72
    %v87 = vpack.c.b16 %v75, %v74
    %v88 = vpack.c.b16 %v77, %v76
    %v89 = vpack.c.b16 %v79, %v78
    %v90 = vpack.c.b16 %v81, %v80
    %v91 = vpack.c.b16 %v83, %v82
    %100 = vmatprep.subr.bf16.mxu0 0
    %101 = vmatpush1.bf16.msra.mxu0 %v84
    %102 = vmatprep.subr.bf16.mxu0 0
    %103 = vmatpush1.bf16.msra.mxu0 %v85
    %104 = vmatprep.subr.bf16.mxu0 0
    %105 = vmatpush1.bf16.msra.mxu0 %v86
    %106 = vmatprep.subr.bf16.mxu0 0
    %107 = vmatpush1.bf16.msra.mxu0 %v87
    %108 = vmatprep.subr.bf16.mxu0 0
    %109 = vmatpush1.bf16.msra.mxu0 %v88
    %110 = vmatprep.subr.bf16.mxu0 0
    %111 = vmatpush1.bf16.msra.mxu0 %v89
    %112 = vmatprep.subr.bf16.mxu0 0
    %113 = vmatpush1.bf16.msra.mxu0 %v90
    %114 = vmatprep.subr.bf16.mxu0 0
    %115 = vmatpush1.bf16.msra.mxu0 %v91
    %116 = vmatprep.subr.bf16.mxu0 0
    %117 = vmatpush1.bf16.msra.mxu0 0
    %118 = vmatprep.subr.bf16.mxu0 0
    %119 = vmatpush1.bf16.msra.mxu0 0
    %120 = vmatprep.subr.bf16.mxu0 0
    %121 = vmatpush1.bf16.msra.mxu0 0
    %122 = vmatprep.subr.bf16.mxu0 0
    %123 = vmatpush1.bf16.msra.mxu0 0
    %124 = vmatprep.subr.bf16.mxu0 0
    %125 = vmatpush1.bf16.msra.mxu0 0
    %126 = vmatprep.subr.bf16.mxu0 0
    %127 = vmatpush1.bf16.msra.mxu0 0
    %128 = vmatprep.subr.bf16.mxu0 0
    %129 = vmatpush1.bf16.msra.mxu0 0
    %130 = vmatprep.subr.bf16.mxu0 0
    %131 = vmatpush1.bf16.msra.mxu0 0
    %132 = vmatprep.mubr.bf16.mxu0 0
    %133 = vmatmul.mubr.bf16.gmra.mrb[0].mxu0 %v50
    %v134 = vpop.f32.mrb[0].mxu0
    %v135 = vadd.f32 0.0, %v134
    %v136 = vpop.f32.mrb[0].mxu0
    %v137 = vpop.f32.mrb[0].mxu0
    %v138 = vadd.f32 0.0, %v137
    %v139 = vpop.f32.mrb[0].mxu0
    %140 = vdwg.mxu0
    %v141 = vadd.f32 %v26, %v135
    %v142 = vadd.f32 %v27, %v138
    %vm143 = vcmask 64512
    %144 = vst.msk [vmem:[#allocation2] sm:$0xff] %vm143, %v141
    %145 = vst.msk [vmem:[#allocation2 + $0x8] sm:$0xff] %vm143, %v142
    // Predicated region
    $region22: #{tpu_custom_call.1} parent=1 // pred_check
      %p146 = pneg %p19
    $region23: #{tpu_custom_call.1} parent=1 // pred_check_branch
      %148 = sbr.rel (%p146) target = $region25
    $region24: #{tpu_custom_call.1} parent=1 // pred_region
      %v149 = vld [vmem:[#allocation2] sm:$0xff]
      %v150 = vld [vmem:[#allocation2 + $0x8] sm:$0xff]
      %v151 = vld [vmem:[%s2] sm:$0xff]
      %v152 = vld [vmem:[%s3] sm:$0x1]
      %v154 = vlaneseq
      %v155 = vshrl.u32 %v154, 7
      %v156 = vsub.s32 0, %v155
      %v157 = vrot.slane %v152, %v156
      %v160 = vsel %vm143, %v149, 0
      %v163 = vsel %vm143, %v150, 0
      %165 = vmatprep.subr.mxu0 0.0
      %166 = vmatpush1.msra.mxu0 %v151
      %167 = vmatprep.subr.mxu0 0.0
      %168 = vmatpush1.msra.mxu0 0.0
      %169 = vmatprep.subr.mxu0 0.0
      %170 = vmatpush1.msra.mxu0 0.0
      %171 = vmatprep.subr.mxu0 0.0
      %172 = vmatpush1.msra.mxu0 0.0
      %173 = vmatprep.subr.mxu0 0.0
      %174 = vmatpush1.msra.mxu0 0.0
      %175 = vmatprep.subr.mxu0 0.0
      %176 = vmatpush1.msra.mxu0 0.0
      %177 = vmatprep.subr.mxu0 0.0
      %178 = vmatpush1.msra.mxu0 0.0
      %179 = vmatprep.subr.mxu0 0.0
      %180 = vmatpush1.msra.mxu0 0.0
      %181 = vmatprep.subr.mxu0 0.0
      %182 = vmatpush1.msra.mxu0 0.0
      %183 = vmatprep.subr.mxu0 0.0
      %184 = vmatpush1.msra.mxu0 0.0
      %185 = vmatprep.subr.mxu0 0.0
      %186 = vmatpush1.msra.mxu0 0.0
      %187 = vmatprep.subr.mxu0 0.0
      %188 = vmatpush1.msra.mxu0 0.0
      %189 = vmatprep.subr.mxu0 0.0
      %190 = vmatpush1.msra.mxu0 0.0
      %191 = vmatprep.subr.mxu0 0.0
      %192 = vmatpush1.msra.mxu0 0.0
      %193 = vmatprep.subr.mxu0 0.0
      %194 = vmatpush1.msra.mxu0 0.0
      %195 = vmatprep.subr.mxu0 0.0
      %196 = vmatpush1.msra.mxu0 0.0
      %197 = vmatprep.subr.mxu0 0.0
      %198 = vmatpush1.msra.mxu0 0.0
      %199 = vmatprep.subr.mxu0 0.0
      %200 = vmatpush1.msra.mxu0 0.0
      %201 = vmatprep.subr.mxu0 0.0
      %202 = vmatpush1.msra.mxu0 0.0
      %203 = vmatprep.subr.mxu0 0.0
      %204 = vmatpush1.msra.mxu0 0.0
      %205 = vmatprep.subr.mxu0 0.0
      %206 = vmatpush1.msra.mxu0 0.0
      %207 = vmatprep.subr.mxu0 0.0
      %208 = vmatpush1.msra.mxu0 0.0
      %209 = vmatprep.subr.mxu0 0.0
      %210 = vmatpush1.msra.mxu0 0.0
      %211 = vmatprep.subr.mxu0 0.0
      %212 = vmatpush1.msra.mxu0 0.0
      %213 = vmatprep.subr.mxu0 0.0
      %214 = vmatpush1.msra.mxu0 0.0
      %215 = vmatprep.subr.mxu0 0.0
      %216 = vmatpush1.msra.mxu0 0.0
      %217 = vmatprep.subr.mxu0 0.0
      %218 = vmatpush1.msra.mxu0 0.0
      %219 = vmatprep.subr.mxu0 0.0
      %220 = vmatpush1.msra.mxu0 0.0
      %221 = vmatprep.subr.mxu0 0.0
      %222 = vmatpush1.msra.mxu0 0.0
      %223 = vmatprep.subr.mxu0 0.0
      %224 = vmatpush1.msra.mxu0 0.0
      %225 = vmatprep.subr.mxu0 0.0
      %226 = vmatpush1.msra.mxu0 0.0
      %227 = vmatprep.subr.mxu0 0.0
      %228 = vmatpush1.msra.mxu0 0.0
      %229 = vmatprep.mubr.f32.mxu0 0.0
      %230 = vmatmul.mubr.f32.gmra.mrb[0].mxu0 %v160
      %v231 = vpop.f32.mrb[0].mxu0
      %v232 = vadd.f32 %v157, %v231
      %v233 = vpop.f32.mrb[0].mxu0
      %234 = vmatprep.mubr.f32.mxu0 0.0
      %235 = vmatmul.mubr.f32.gmra.mrb[0].mxu0 %v163
      %v236 = vpop.f32.mrb[0].mxu0
      %v237 = vadd.f32 %v157, %v236
      %v238 = vpop.f32.mrb[0].mxu0
      %239 = vdwg.mxu0
      %240 = vst [vmem:[#allocation3] sm:$0xff] %v232
      %241 = vst [vmem:[#allocation3 + $0x8] sm:$0xff] %v237
    $region25: #{tpu_custom_call.1} parent=1 // pred_fallthru
      _
    // Predicated region
    $region26: #{tpu_custom_call.1} parent=1 // pred_check
      _
    $region27: #{tpu_custom_call.1} parent=1 // pred_check_branch
      %243 = sbr.rel (0) target = $region29
    $region28: #{tpu_custom_call.1} parent=1 // pred_region
      %s245 = ssub.s32 256, 256
      %246 = vsyncadd [#allocation4], %s245
      %s247 = sshll.u32 [#allocation3], 4
      %s248 = int_to_ptr.vmem [resolvable:$true] %s247
      %253 = dma.vmem_to_hbm [thread:$0]  %s248, 256, %s4, [#allocation4], 128, 128, 8
    $region29: #{tpu_custom_call.1} parent=1 // pred_fallthru
      _
    // Predicated region
    $region30: #{tpu_custom_call.1} parent=1 // pred_check
      _
    $region31: #{tpu_custom_call.1} parent=1 // pred_check_branch
      %255 = sbr.rel (0) target = $region33
    $region32: #{tpu_custom_call.1} parent=1 // pred_region
      %256 = dma.done [#allocation4], 256
    $region33: #{tpu_custom_call.1} parent=1 // pred_fallthru
      _
    %257 = vsyncpa [#allocation4], 1

</llo_original>
